<compile_context>
chip_gen: v6e
topology: v6e:2x2x1
jax: 0.10.0
libtpu: 0.0.40
codegen_flags: <defaults>
</compile_context>

<pallas_src>
import math

import jax
import jax.numpy as jnp
from jax.experimental import pallas as pl
from jax.experimental.pallas import tpu as pltpu

_SUBLANE = 8
_MIB = 1024 * 1024


def _build_sinusoidal_pe(emb_size: int, maxlen: int, dtype=jnp.float32) -> jnp.ndarray:
    """Deterministic sinusoidal table, shape (1, maxlen, emb_size). Build once at init."""
    pos = jnp.arange(0, maxlen, dtype=jnp.float32)[:, None]                      # (maxlen, 1)
    d = jnp.exp(jnp.arange(0, emb_size, 2, dtype=jnp.float32)
                * (-(math.log(10000.0) / emb_size)))                             # (emb_size/2,)
    ang = pos * d                                                                # (maxlen, emb/2)
    pe = jnp.zeros((maxlen, emb_size), dtype=jnp.float32)
    pe = pe.at[:, 0::2].set(jnp.sin(ang))
    pe = pe.at[:, 1::2].set(jnp.cos(ang))
    return pe[None, :, :].astype(dtype)                                          # (1, maxlen, emb)


def _vmem_capacity_bytes() -> int:
    """Trace-time VMEM capacity of the current generation; conservative fallback."""
    try:
        return int(pltpu.get_tpu_info().vmem_capacity_bytes)
    except Exception:
        return 64 * _MIB   # v7x per-TC physical VMEM (smallest across generations)


def _pe_add_kernel(x_ref, pe_ref, o_ref):
    # x_ref/o_ref: (tile_b, tile_s, E); pe_ref: (1, tile_s, E).
    # Broadcast over the leading batch dim happens on the VPU.
    o_ref[...] = x_ref[...] + pe_ref[...]


def positional_encoding_forward(token_embedding: jnp.ndarray,
                                pe: jnp.ndarray,
                                *,
                                donate_input: bool = False) -> jnp.ndarray:
    """token_embedding: (B, S, E); pe: (1, maxlen, E) with maxlen >= S."""
    B, S, E = token_embedding.shape
    dtype = token_embedding.dtype
    itemsize = jnp.dtype(dtype).itemsize
    assert pe.ndim == 3 and pe.shape[0] == 1 and pe.shape[2] == E and pe.shape[1] >= S

    if pe.dtype != dtype:
        # Prefer pre-casting the table at init; cheap (S*E) fallback otherwise.
        pe = pe.astype(dtype)

    # ---- block sizing (per-generation VMEM budget) --------------------------
    vmem_cap = _vmem_capacity_bytes()
    # double-buffered x + out + pe  ->  ~6 live blocks; keep them to ~1/4 of VMEM,
    # capped at 24 MiB (v7x-safe), floored at 4 MiB (multi-MiB blocks ~ HBM roofline).
    block_budget = min(24 * _MIB, max(4 * _MIB, vmem_cap // 4))
    target_block_bytes = block_budget // 6

    if S >= _SUBLANE:
        rows = max(_SUBLANE,
                   (target_block_bytes // (E * itemsize)) // _SUBLANE * _SUBLANE)
        tile_s = min((S // _SUBLANE) * _SUBLANE, rows)   # multiple of 8, >= 8
        pe_in = pe                                       # full table, no wrapper slice
    else:
        # Tiny-sequence fallback: full-extent blocks (legal for any S).
        tile_s = S
        pe_in = pe[:, :S, :]
    grid_s = pl.cdiv(S, tile_s)                          # ragged last block is masked

    tile_b = 1
    if grid_s == 1:
        # Whole sequence fits in one block: grow the batch dim of the block instead
        # so small-S / large-B shapes still get multi-MiB, low-overhead grid steps.
        slab_bytes = pl.cdiv(S, _SUBLANE) * _SUBLANE * E * itemsize
        tile_b = max(1, min(B, target_block_bytes // max(1, slab_bytes)))
        while B % tile_b:                                # keep it an exact divisor
            tile_b -= 1
    grid_b = B // tile_b

    vmem_limit = int(min(vmem_cap * 3 // 4, max(16 * _MIB, 3 * block_budget)))

    cost = pl.CostEstimate(
        flops=B * S * E,
        transcendentals=0,
        bytes_accessed=(2 * B * S * E + S * E) * itemsize,  # x read + out write + pe once
    )

    kwargs = {}
    if donate_input:
        kwargs["input_output_aliases"] = {0: 0}          # write the sum in place over x

    out = pl.pallas_call(
        _pe_add_kernel,
        out_shape=jax.ShapeDtypeStruct((B, S, E), dtype),
        grid=(grid_s, grid_b),
        in_specs=[
            pl.BlockSpec((tile_b, tile_s, E), lambda si, bi: (bi, si, 0)),
            # batch (innermost grid axis) ignored -> pe block stays VMEM-resident
            # across the batch sweep; the table is DMA'd from HBM exactly once.
            pl.BlockSpec((1, tile_s, E), lambda si, bi: (0, si, 0)),
        ],
        out_specs=pl.BlockSpec((tile_b, tile_s, E), lambda si, bi: (bi, si, 0)),
        compiler_params=pltpu.CompilerParams(
            dimension_semantics=("parallel", "arbitrary"),
            vmem_limit_bytes=vmem_limit,
        ),
        cost_estimate=cost,
        **kwargs,
    )(token_embedding, pe_in)

    return out


if __name__ == "__main__":
    # Small deterministic example consistent with the module's forward:
    # token_embedding of shape (batch=2, seq=8, emb_size=32), maxlen=16.
    emb_size, maxlen = 32, 16
    B, S = 2, 8

    key = jax.random.PRNGKey(0)
    token_embedding = jax.random.normal(key, (B, S, emb_size), dtype=jnp.float32)

    # Built once at "init", pre-cast to the model dtype (mirrors register_buffer).
    pe = _build_sinusoidal_pe(emb_size, maxlen, dtype=token_embedding.dtype)     # (1, 16, 32)

    out = positional_encoding_forward(token_embedding, pe)
    out = jax.block_until_ready(out)

    # Reference check in plain JAX (same math as the PyTorch forward).
    ref = token_embedding + pe[:, :S, :]
    assert out.shape == (B, S, emb_size)
    assert jnp.allclose(out, ref, atol=1e-6, rtol=1e-6)

    print("KERNEL_OK")
</pallas_src>

<mosaic_0001>
module attributes {stable_mosaic.version = 11 : i64} {
  func.func @_pe_add_kernel(%arg0: i32, %arg1: i32, %arg2: memref<2x8x32xf32, #tpu.memory_space<vmem>>, %arg3: memref<1x8x32xf32, #tpu.memory_space<vmem>>, %arg4: memref<2x8x32xf32, #tpu.memory_space<vmem>>) attributes {dimension_semantics = [#tpu.dimension_semantics<parallel>, #tpu.dimension_semantics<arbitrary>], iteration_bounds = array<i64: 1, 1>, scalar_prefetch = 0 : i64, scratch_operands = 0 : i64, tpu.core_type = #tpu.core_type<tc>, window_params = [{transform_indices = @transform_0, window_bounds = array<i64: 2, 8, 32>}, {transform_indices = @transform_1, window_bounds = array<i64: 1, 8, 32>}, {transform_indices = @transform_2, window_bounds = array<i64: 2, 8, 32>}]} {
    %c0 = arith.constant 0 : index
    %c0_0 = arith.constant 0 : index
    %c0_1 = arith.constant 0 : index
    %0 = vector.load %arg2[%c0, %c0_0, %c0_1] : memref<2x8x32xf32, #tpu.memory_space<vmem>>, vector<2x8x32xf32>
    %c0_2 = arith.constant 0 : index
    %c0_3 = arith.constant 0 : index
    %c0_4 = arith.constant 0 : index
    %1 = vector.load %arg3[%c0_2, %c0_3, %c0_4] : memref<1x8x32xf32, #tpu.memory_space<vmem>>, vector<1x8x32xf32>
    %2 = vector.broadcast %1 : vector<1x8x32xf32> to vector<2x8x32xf32>
    %3 = arith.addf %0, %2 : vector<2x8x32xf32>
    %c0_5 = arith.constant 0 : index
    %c0_6 = arith.constant 0 : index
    %c0_7 = arith.constant 0 : index
    %4 = vector.load %arg4[%c0_5, %c0_6, %c0_7] : memref<2x8x32xf32, #tpu.memory_space<vmem>>, vector<2x8x32xf32>
    tpu.vector_store %arg4[%c0_5, %c0_6, %c0_7], %3 {strides = array<i32>} : memref<2x8x32xf32, #tpu.memory_space<vmem>>, vector<2x8x32xf32>,
    return
  }
  func.func @transform_0(%arg0: i32, %arg1: i32) -> (i32, i32, i32) {
    %c0_i32 = arith.constant 0 : i32
    %c0_i32_0 = arith.constant 0 : i32
    return %arg1, %arg0, %c0_i32 : i32, i32, i32
  }
  func.func @transform_1(%arg0: i32, %arg1: i32) -> (i32, i32, i32) {
    %c0_i32 = arith.constant 0 : i32
    %c0_i32_0 = arith.constant 0 : i32
    %c0_i32_1 = arith.constant 0 : i32
    return %c0_i32, %arg0, %c0_i32_0 : i32, i32, i32
  }
  func.func @transform_2(%arg0: i32, %arg1: i32) -> (i32, i32, i32) {
    %c0_i32 = arith.constant 0 : i32
    %c0_i32_0 = arith.constant 0 : i32
    return %arg1, %arg0, %c0_i32 : i32, i32, i32
  }
}

</mosaic_0001>

<llo_original>
// kernel: tpu_custom_call.1
$region0: #{tpu_custom_call.1}
  #allocation0 [shape = 'u32[]', space=smem, size = 0x4, offset = 0x4, fixed_abs, tag = 'smem constant byte address 0x4 - core index']
  #allocation1 [shape = 'u32[144,128]{1,0:T(1,128)}', space=vmem, size = 0x12000, scoped, tag = 'internal scratch']
  %s0 = inlined_call_operand.hbm [shape: f32[2,8,32], index: 0, kind: input, shape index: {}]
  %s1 = inlined_call_operand.hbm [shape: f32[1,16,32], index: 1, kind: input, shape index: {}]
  %s2 = inlined_call_operand.hbm [shape: f32[2,8,32], index: 2, kind: output, shape index: {}]
  %s3 = sld [smem:[#allocation0]]
  $region26: #{tpu_custom_call.1} parent=0
    _
  %s5 = ssub.s32 1, %s3
  %s6 = scalar_select 0, %s5, %s3
  $region1: #{tpu_custom_call.1} parent=0
    #allocation2 [shape = 'u8[8192]{0}', space=vmem, size = 0x2000, scoped, tag = 'input window, operand 0, single buffered']
    #allocation3 [shape = 's32[1]{0}', space=sflag, size = 0x4, scoped, tag = 'scoped memory for tpu_custom_call.1']
    #allocation4 [shape = 's32[1]{0}', space=sflag, size = 0x4, scoped, tag = 'scoped memory for tpu_custom_call.1']
    #allocation5 [shape = 'u8[4096]{0}', space=vmem, size = 0x1000, scoped, tag = 'input window, operand 1, single buffered']
    #allocation6 [shape = 's32[1]{0}', space=sflag, size = 0x4, scoped, tag = 'scoped memory for tpu_custom_call.1']
    #allocation7 [shape = 'u8[8192]{0}', space=vmem, size = 0x2000, scoped, tag = 'output window, operand 0, single buffered']
    %7 = vsyncpa [#allocation3], 0
    %8 = vsyncpa [#allocation6], 0
    %9 = vsyncpa [#allocation4], 0
    // Predicated region
    $region2: #{tpu_custom_call.1} parent=1 // pred_check
      _
    $region3: #{tpu_custom_call.1} parent=1 // pred_check_branch
      %11 = sbr.rel (0) target = $region5
    $region4: #{tpu_custom_call.1} parent=1 // pred_region
      %s13 = ssub.s32 256, 256
      %14 = vsyncadd [#allocation3], %s13
      %s15 = sshll.u32 [#allocation2], 4
      %s16 = int_to_ptr.vmem [resolvable:$true] %s15
      %21 = dma.hbm_to_vmem [thread:$0]  %s0, 256, %s16, [#allocation3], 128, 128, 8
    $region5: #{tpu_custom_call.1} parent=1 // pred_fallthru
      _
    // Predicated region
    $region6: #{tpu_custom_call.1} parent=1 // pred_check
      _
    $region7: #{tpu_custom_call.1} parent=1 // pred_check_branch
      %23 = sbr.rel (0) target = $region9
    $region8: #{tpu_custom_call.1} parent=1 // pred_region
      %s25 = ssub.s32 128, 128
      %26 = vsyncadd [#allocation6], %s25
      %s28 = sshll.u32 [#allocation5], 4
      %s29 = int_to_ptr.vmem [resolvable:$true] %s28
      %31 = dma.hbm_to_vmem [thread:$0]  %s1, 128, %s29, [#allocation6]
    $region9: #{tpu_custom_call.1} parent=1 // pred_fallthru
      _
    // Predicated region
    $region10: #{tpu_custom_call.1} parent=1 // pred_check
      _
    $region11: #{tpu_custom_call.1} parent=1 // pred_check_branch
      %33 = sbr.rel (0) target = $region13
    $region12: #{tpu_custom_call.1} parent=1 // pred_region
      %34 = dma.done [#allocation3], 256
    $region13: #{tpu_custom_call.1} parent=1 // pred_fallthru
      _
    // Predicated region
    $region14: #{tpu_custom_call.1} parent=1 // pred_check
      _
    $region15: #{tpu_custom_call.1} parent=1 // pred_check_branch
      %36 = sbr.rel (0) target = $region17
    $region16: #{tpu_custom_call.1} parent=1 // pred_region
      %37 = dma.done [#allocation6], 128
    $region17: #{tpu_custom_call.1} parent=1 // pred_fallthru
      _
    %v38 = vld [vmem:[#allocation2] sm:$0xff]
    %v39 = vld [vmem:[#allocation2 + $0x8] sm:$0xff]
    %v40 = vld [vmem:[#allocation5] sm:$0xff]
    %v41 = vadd.f32 %v38, %v40
    %v42 = vadd.f32 %v39, %v40
    %vm43 = vcmask 261120
    %44 = vst.msk [vmem:[#allocation7] sm:$0xff] %vm43, %v41
    %45 = vst.msk [vmem:[#allocation7 + $0x8] sm:$0xff] %vm43, %v42
    // Predicated region
    $region18: #{tpu_custom_call.1} parent=1 // pred_check
      _
    $region19: #{tpu_custom_call.1} parent=1 // pred_check_branch
      %47 = sbr.rel (0) target = $region21
    $region20: #{tpu_custom_call.1} parent=1 // pred_region
      %s49 = ssub.s32 256, 256
      %50 = vsyncadd [#allocation4], %s49
      %s51 = sshll.u32 [#allocation7], 4
      %s52 = int_to_ptr.vmem [resolvable:$true] %s51
      %57 = dma.vmem_to_hbm [thread:$0]  %s52, 256, %s2, [#allocation4], 128, 128, 8
    $region21: #{tpu_custom_call.1} parent=1 // pred_fallthru
      _
    // Predicated region
    $region22: #{tpu_custom_call.1} parent=1 // pred_check
      _
    $region23: #{tpu_custom_call.1} parent=1 // pred_check_branch
      %59 = sbr.rel (0) target = $region25
    $region24: #{tpu_custom_call.1} parent=1 // pred_region
      %60 = dma.done [#allocation4], 256
    $region25: #{tpu_custom_call.1} parent=1 // pred_fallthru
      _
    %61 = vsyncpa [#allocation3], 1
    %62 = vsyncpa [#allocation6], 1
    %63 = vsyncpa [#allocation4], 1

</llo_original>
